<compile_context>
chip_gen: v6e
topology: v6e:2x2x1
jax: 0.10.0
libtpu: 0.0.40
codegen_flags: <defaults>
</compile_context>

<pallas_src>
import jax
import jax.numpy as jnp
from jax.experimental import pallas as pl
from jax.experimental.pallas import tpu as pltpu

LN_EPS = 1e-5  # PyTorch nn.LayerNorm default


def _channel_context_kernel(ctx_ref, sp_ref, w1t_ref, b1_ref, g_ref, beta_ref,
                            w2t_ref, b2_ref, o_ref):
    # ctx_ref / sp_ref / o_ref : (1, D, T)  -- spatial positions on the lane axis
    # w1t : (R, D)   w2t : (D, R)   b1 / g / beta : (R, 1)   b2 : (D, 1)
    x = ctx_ref[0].astype(jnp.float32)                        # (D, T)

    # 1x1 conv #1: (R, D) @ (D, T) -> (R, T), bias added before LN (as in conv1)
    h = jnp.dot(w1t_ref[...], x, preferred_element_type=jnp.float32) + b1_ref[...]

    # LayerNorm over the channel axis R (sublane/XLU reduction), biased variance.
    mean = jnp.mean(h, axis=0, keepdims=True)                 # (1, T)
    var = jnp.mean((h - mean) ** 2, axis=0, keepdims=True)    # (1, T)
    hn = (h - mean) * jax.lax.rsqrt(var + LN_EPS)             # rsqrt -> EUP
    hn = hn * g_ref[...] + beta_ref[...]

    hr = jnp.maximum(hn, 0.0)                                 # ReLU (VPU)

    # 1x1 conv #2: (D, R) @ (R, T) -> (D, T)
    y = jnp.dot(w2t_ref[...], hr, preferred_element_type=jnp.float32) + b2_ref[...]

    o_ref[0] = (sp_ref[0].astype(jnp.float32) + y).astype(o_ref.dtype)


def _pick_spatial_tile(hw, d, itemsize, *, target=2048, vmem_budget=12 << 20):
    """Largest lane-dense tile (multiple of 128) that divides hw, capped at
    `target` lanes and at a VMEM budget for 3 double-buffered (1, D, T)
    blocks.  Falls back to the full extent (always legal) for awkward sizes."""
    # TODO(synk): HW that is neither small nor a multiple of 128 falls back to
    # a single full-extent block per batch instead of padded/masked tiling.
    if hw <= 256:
        return hw
    if hw % 128 != 0:
        return hw                      # full extent: correct, single big tile
    # Budget: ctx + spatial + out blocks, each double-buffered.
    t_cap = vmem_budget // (6 * d * max(itemsize, 4))
    t_cap = max(128, (t_cap // 128) * 128)
    t = min(hw, min(target, t_cap))
    t = max(128, (t // 128) * 128)
    while hw % t != 0:
        t -= 128
    return t


def channel_context(spatial_nchw, context_nchw, params, *, tile_t=2048):
    """spatial_nchw, context_nchw: (B, D, H, W).  Returns (B, D, H, W)."""
    w1t, b1, gamma, beta, w2t, b2 = params
    B, D, H, W = context_nchw.shape
    R = w1t.shape[0]
    HW = H * W

    # Free, contiguous reshapes -- no transposes, no extra HBM traffic.
    ctx = context_nchw.reshape(B, D, HW)
    sp = spatial_nchw.reshape(B, D, HW)

    itemsize = jnp.dtype(spatial_nchw.dtype).itemsize
    T = _pick_spatial_tile(HW, D, itemsize, target=tile_t)
    grid = (B, HW // T)

    b1_2d = b1.reshape(R, 1)
    g_2d = gamma.reshape(R, 1)
    be_2d = beta.reshape(R, 1)
    b2_2d = b2.reshape(D, 1)

    blk = pl.BlockSpec((1, D, T), lambda b, s: (b, 0, s))
    full = lambda shape: pl.BlockSpec(shape, lambda b, s: (0,) * len(shape))

    cost = pl.CostEstimate(
        flops=4 * B * HW * D * R,
        transcendentals=B * HW,                       # one rsqrt per position
        bytes_accessed=3 * B * HW * D * itemsize
        + (2 * D * R + 2 * R + 2 * D) * 4,
    )

    out = pl.pallas_call(
        _channel_context_kernel,
        out_shape=jax.ShapeDtypeStruct((B, D, HW), spatial_nchw.dtype),
        grid_spec=pltpu.PrefetchScalarGridSpec(
            num_scalar_prefetch=0,
            grid=grid,
            in_specs=[
                blk,               # context block   (1, D, T)
                blk,               # spatial block   (1, D, T)
                full((R, D)),      # w1 (conv1 weight, reshaped)
                full((R, 1)),      # b1
                full((R, 1)),      # gamma
                full((R, 1)),      # beta
                full((D, R)),      # w2 (conv2 weight, reshaped)
                full((D, 1)),      # b2
            ],
            out_specs=blk,
        ),
        compiler_params=pltpu.CompilerParams(
            dimension_semantics=("parallel", "parallel"),
            vmem_limit_bytes=48 << 20),
        cost_estimate=cost,
    )(ctx, sp, w1t, b1_2d, g_2d, be_2d, w2t, b2_2d)

    return out.reshape(B, D, H, W)


def init_params(key, D, k):
    """Deterministic synthetic parameters matching the PyTorch module shapes."""
    R = max(1, D // k)
    k1, k2, k3, k4 = jax.random.split(key, 4)
    # conv1.weight (R, D, 1, 1) -> (R, D); conv2.weight (D, R, 1, 1) -> (D, R)
    w1t = jax.random.normal(k1, (R, D), jnp.float32) * (1.0 / jnp.sqrt(D))
    b1 = jax.random.normal(k2, (R,), jnp.float32) * 0.01
    gamma = jnp.ones((R,), jnp.float32)
    beta = jnp.zeros((R,), jnp.float32)
    w2t = jax.random.normal(k3, (D, R), jnp.float32) * (1.0 / jnp.sqrt(R))
    b2 = jax.random.normal(k4, (D,), jnp.float32) * 0.01
    return (w1t, b1, gamma, beta, w2t, b2)


def channel_context_ref(spatial_nchw, context_nchw, params):
    """Pure-JAX reference mirroring the PyTorch forward (NCHW)."""
    w1t, b1, gamma, beta, w2t, b2 = params
    h = jnp.einsum('bdhw,rd->brhw', context_nchw, w1t) + b1[None, :, None, None]
    mean = jnp.mean(h, axis=1, keepdims=True)
    var = jnp.mean((h - mean) ** 2, axis=1, keepdims=True)
    hn = (h - mean) / jnp.sqrt(var + LN_EPS)
    hn = hn * gamma[None, :, None, None] + beta[None, :, None, None]
    hr = jnp.maximum(hn, 0.0)
    y = jnp.einsum('brhw,dr->bdhw', hr, w2t) + b2[None, :, None, None]
    return spatial_nchw + y


if __name__ == "__main__":
    # args.encoder_size = 32, args.channel_reduction = 4  ->  R = 8
    B, D, H, W = 2, 32, 8, 8
    key = jax.random.PRNGKey(0)
    kp, ks, kc = jax.random.split(key, 3)

    params = init_params(kp, D, k=4)
    spatial = jax.random.normal(ks, (B, D, H, W), jnp.float32)
    context = jax.random.normal(kc, (B, D, H, W), jnp.float32)

    out = jax.block_until_ready(channel_context(spatial, context, params))

    ref = channel_context_ref(spatial, context, params)
    assert out.shape == (B, D, H, W)
    assert jnp.allclose(out, ref, atol=1e-4, rtol=1e-4), "mismatch vs reference"

    print("KERNEL_OK")
</pallas_src>

<mosaic_0001>
module attributes {stable_mosaic.version = 11 : i64} {
  func.func @_channel_context_kernel(%arg0: i32, %arg1: i32, %arg2: memref<1x32x64xf32, #tpu.memory_space<vmem>>, %arg3: memref<1x32x64xf32, #tpu.memory_space<vmem>>, %arg4: memref<8x32xf32, #tpu.memory_space<vmem>>, %arg5: memref<8x1xf32, #tpu.memory_space<vmem>>, %arg6: memref<8x1xf32, #tpu.memory_space<vmem>>, %arg7: memref<8x1xf32, #tpu.memory_space<vmem>>, %arg8: memref<32x8xf32, #tpu.memory_space<vmem>>, %arg9: memref<32x1xf32, #tpu.memory_space<vmem>>, %arg10: memref<1x32x64xf32, #tpu.memory_space<vmem>>) attributes {dimension_semantics = [#tpu.dimension_semantics<parallel>, #tpu.dimension_semantics<parallel>], iteration_bounds = array<i64: 2, 1>, scalar_prefetch = 0 : i64, scratch_operands = 0 : i64, tpu.core_type = #tpu.core_type<tc>, window_params = [{transform_indices = @transform_0, window_bounds = array<i64: 1, 32, 64>}, {transform_indices = @transform_1, window_bounds = array<i64: 1, 32, 64>}, {pipeline_mode = #tpu.pipeline_mode<synchronous>, transform_indices = @transform_2, window_bounds = array<i64: 8, 32>}, {pipeline_mode = #tpu.pipeline_mode<synchronous>, transform_indices = @transform_3, window_bounds = array<i64: 8, 1>}, {pipeline_mode = #tpu.pipeline_mode<synchronous>, transform_indices = @transform_4, window_bounds = array<i64: 8, 1>}, {pipeline_mode = #tpu.pipeline_mode<synchronous>, transform_indices = @transform_5, window_bounds = array<i64: 8, 1>}, {pipeline_mode = #tpu.pipeline_mode<synchronous>, transform_indices = @transform_6, window_bounds = array<i64: 32, 8>}, {pipeline_mode = #tpu.pipeline_mode<synchronous>, transform_indices = @transform_7, window_bounds = array<i64: 32, 1>}, {transform_indices = @transform_8, window_bounds = array<i64: 1, 32, 64>}]} {
    %c0 = arith.constant 0 : index
    %c0_0 = arith.constant 0 : index
    %c0_1 = arith.constant 0 : index
    %0 = vector.load %arg2[%c0, %c0_0, %c0_1] : memref<1x32x64xf32, #tpu.memory_space<vmem>>, vector<1x32x64xf32>
    %1 = vector.shape_cast %0 : vector<1x32x64xf32> to vector<32x64xf32>
    %c0_2 = arith.constant 0 : index
    %c0_3 = arith.constant 0 : index
    %2 = vector.load %arg4[%c0_2, %c0_3] : memref<8x32xf32, #tpu.memory_space<vmem>>, vector<8x32xf32>
    %cst = arith.constant dense<0.000000e+00> : vector<8x64xf32>
    %3 = tpu.matmul %2, %1, %cst {dimension_numbers = #tpu.dot_dimension_numbers<[1], [0], [0], [1], [0, 0, 1, 1], [], []>} : vector<8x32xf32>, vector<32x64xf32>, vector<8x64xf32> -> vector<8x64xf32>
    %c0_4 = arith.constant 0 : index
    %c0_5 = arith.constant 0 : index
    %4 = vector.load %arg5[%c0_4, %c0_5] : memref<8x1xf32, #tpu.memory_space<vmem>>, vector<8x1xf32>
    %5 = vector.broadcast %4 : vector<8x1xf32> to vector<8x64xf32>
    %6 = arith.addf %3, %5 : vector<8x64xf32>
    %cst_6 = arith.constant dense<0.000000e+00> : vector<64xf32>
    %7 = vector.multi_reduction <add>, %6, %cst_6 [0] : vector<8x64xf32> to vector<64xf32>
    %8 = vector.shape_cast %7 : vector<64xf32> to vector<1x64xf32>
    %cst_7 = arith.constant 8.000000e+00 : f32
    %9 = vector.broadcast %cst_7 : f32 to vector<1x64xf32>
    %10 = arith.divf %8, %9 : vector<1x64xf32>
    %11 = vector.broadcast %10 : vector<1x64xf32> to vector<8x64xf32>
    %12 = arith.subf %6, %11 : vector<8x64xf32>
    %13 = arith.mulf %12, %12 : vector<8x64xf32>
    %cst_8 = arith.constant dense<0.000000e+00> : vector<64xf32>
    %14 = vector.multi_reduction <add>, %13, %cst_8 [0] : vector<8x64xf32> to vector<64xf32>
    %15 = vector.shape_cast %14 : vector<64xf32> to vector<1x64xf32>
    %cst_9 = arith.constant 8.000000e+00 : f32
    %16 = vector.broadcast %cst_9 : f32 to vector<1x64xf32>
    %17 = arith.divf %15, %16 : vector<1x64xf32>
    %18 = vector.broadcast %10 : vector<1x64xf32> to vector<8x64xf32>
    %19 = arith.subf %6, %18 : vector<8x64xf32>
    %cst_10 = arith.constant 9.99999974E-6 : f32
    %20 = vector.broadcast %cst_10 : f32 to vector<1x64xf32>
    %21 = arith.addf %17, %20 : vector<1x64xf32>
    %22 = math.rsqrt %21 : vector<1x64xf32>
    %23 = vector.broadcast %22 : vector<1x64xf32> to vector<8x64xf32>
    %24 = arith.mulf %19, %23 : vector<8x64xf32>
    %c0_11 = arith.constant 0 : index
    %c0_12 = arith.constant 0 : index
    %25 = vector.load %arg6[%c0_11, %c0_12] : memref<8x1xf32, #tpu.memory_space<vmem>>, vector<8x1xf32>
    %26 = vector.broadcast %25 : vector<8x1xf32> to vector<8x64xf32>
    %27 = arith.mulf %24, %26 : vector<8x64xf32>
    %c0_13 = arith.constant 0 : index
    %c0_14 = arith.constant 0 : index
    %28 = vector.load %arg7[%c0_13, %c0_14] : memref<8x1xf32, #tpu.memory_space<vmem>>, vector<8x1xf32>
    %29 = vector.broadcast %28 : vector<8x1xf32> to vector<8x64xf32>
    %30 = arith.addf %27, %29 : vector<8x64xf32>
    %cst_15 = arith.constant 0.000000e+00 : f32
    %31 = vector.broadcast %cst_15 : f32 to vector<8x64xf32>
    %32 = arith.maximumf %30, %31 : vector<8x64xf32>
    %c0_16 = arith.constant 0 : index
    %c0_17 = arith.constant 0 : index
    %33 = vector.load %arg8[%c0_16, %c0_17] : memref<32x8xf32, #tpu.memory_space<vmem>>, vector<32x8xf32>
    %cst_18 = arith.constant dense<0.000000e+00> : vector<32x64xf32>
    %34 = tpu.matmul %33, %32, %cst_18 {dimension_numbers = #tpu.dot_dimension_numbers<[1], [0], [0], [1], [0, 0, 1, 1], [], []>} : vector<32x8xf32>, vector<8x64xf32>, vector<32x64xf32> -> vector<32x64xf32>
    %c0_19 = arith.constant 0 : index
    %c0_20 = arith.constant 0 : index
    %35 = vector.load %arg9[%c0_19, %c0_20] : memref<32x1xf32, #tpu.memory_space<vmem>>, vector<32x1xf32>
    %36 = vector.broadcast %35 : vector<32x1xf32> to vector<32x64xf32>
    %37 = arith.addf %34, %36 : vector<32x64xf32>
    %c0_21 = arith.constant 0 : index
    %c0_22 = arith.constant 0 : index
    %c0_23 = arith.constant 0 : index
    %38 = vector.load %arg3[%c0_21, %c0_22, %c0_23] : memref<1x32x64xf32, #tpu.memory_space<vmem>>, vector<1x32x64xf32>
    %39 = vector.shape_cast %38 : vector<1x32x64xf32> to vector<32x64xf32>
    %40 = arith.addf %39, %37 : vector<32x64xf32>
    %c0_24 = arith.constant 0 : index
    %c0_25 = arith.constant 0 : index
    %c0_26 = arith.constant 0 : index
    %41 = vector.load %arg10[%c0_24, %c0_25, %c0_26] : memref<1x32x64xf32, #tpu.memory_space<vmem>>, vector<1x32x64xf32>
    %42 = vector.shape_cast %41 : vector<1x32x64xf32> to vector<32x64xf32>
    %43 = vector.shape_cast %40 : vector<32x64xf32> to vector<1x32x64xf32>
    tpu.vector_store %arg10[%c0_24, %c0_25, %c0_26], %43 {strides = array<i32>} : memref<1x32x64xf32, #tpu.memory_space<vmem>>, vector<1x32x64xf32>,
    return
  }
  func.func @transform_0(%arg0: i32, %arg1: i32) -> (i32, i32, i32) {
    %c0_i32 = arith.constant 0 : i32
    %c0_i32_0 = arith.constant 0 : i32
    return %arg0, %c0_i32, %arg1 : i32, i32, i32
  }
  func.func @transform_1(%arg0: i32, %arg1: i32) -> (i32, i32, i32) {
    %c0_i32 = arith.constant 0 : i32
    %c0_i32_0 = arith.constant 0 : i32
    return %arg0, %c0_i32, %arg1 : i32, i32, i32
  }
  func.func @transform_2(%arg0: i32, %arg1: i32) -> (i32, i32) {
    %c0_i32 = arith.constant 0 : i32
    %c0_i32_0 = arith.constant 0 : i32
    %c0_i32_1 = arith.constant 0 : i32
    return %c0_i32, %c0_i32_0 : i32, i32
  }
  func.func @transform_3(%arg0: i32, %arg1: i32) -> (i32, i32) {
    %c0_i32 = arith.constant 0 : i32
    %c0_i32_0 = arith.constant 0 : i32
    %c0_i32_1 = arith.constant 0 : i32
    return %c0_i32, %c0_i32_0 : i32, i32
  }
  func.func @transform_4(%arg0: i32, %arg1: i32) -> (i32, i32) {
    %c0_i32 = arith.constant 0 : i32
    %c0_i32_0 = arith.constant 0 : i32
    %c0_i32_1 = arith.constant 0 : i32
    return %c0_i32, %c0_i32_0 : i32, i32
  }
  func.func @transform_5(%arg0: i32, %arg1: i32) -> (i32, i32) {
    %c0_i32 = arith.constant 0 : i32
    %c0_i32_0 = arith.constant 0 : i32
    %c0_i32_1 = arith.constant 0 : i32
    return %c0_i32, %c0_i32_0 : i32, i32
  }
  func.func @transform_6(%arg0: i32, %arg1: i32) -> (i32, i32) {
    %c0_i32 = arith.constant 0 : i32
    %c0_i32_0 = arith.constant 0 : i32
    %c0_i32_1 = arith.constant 0 : i32
    return %c0_i32, %c0_i32_0 : i32, i32
  }
  func.func @transform_7(%arg0: i32, %arg1: i32) -> (i32, i32) {
    %c0_i32 = arith.constant 0 : i32
    %c0_i32_0 = arith.constant 0 : i32
    %c0_i32_1 = arith.constant 0 : i32
    return %c0_i32, %c0_i32_0 : i32, i32
  }
  func.func @transform_8(%arg0: i32, %arg1: i32) -> (i32, i32, i32) {
    %c0_i32 = arith.constant 0 : i32
    %c0_i32_0 = arith.constant 0 : i32
    return %arg0, %c0_i32, %arg1 : i32, i32, i32
  }
}

</mosaic_0001>

<llo_original>
// kernel: tpu_custom_call.1
$region0: #{tpu_custom_call.1}
  #allocation0 [shape = 'u32[]', space=smem, size = 0x4, offset = 0x4, fixed_abs, tag = 'smem constant byte address 0x4 - core index']
  #allocation1 [shape = 'u32[144,128]{1,0:T(1,128)}', space=vmem, size = 0x12000, scoped, tag = 'internal scratch']
  %s0 = inlined_call_operand.vmem [shape: f32[2,32,64], index: 0, kind: input, shape index: {}]
  %s1 = inlined_call_operand.hbm [shape: f32[2,32,64], index: 1, kind: input, shape index: {}]
  %s2 = inlined_call_operand.vmem [shape: f32[8,32], index: 2, kind: input, shape index: {}]
  %s3 = inlined_call_operand.vmem [shape: f32[8,1], index: 3, kind: input, shape index: {}]
  %s4 = inlined_call_operand.vmem [shape: f32[8,1], index: 4, kind: input, shape index: {}]
  %s5 = inlined_call_operand.vmem [shape: f32[8,1], index: 5, kind: input, shape index: {}]
  %s6 = inlined_call_operand.vmem [shape: f32[32,8], index: 6, kind: input, shape index: {}]
  %s7 = inlined_call_operand.vmem [shape: f32[32,1], index: 7, kind: input, shape index: {}]
  %s8 = inlined_call_operand.hbm [shape: f32[2,32,64], index: 8, kind: output, shape index: {}]
  %s9 = sld [smem:[#allocation0]]
  $region69: #{tpu_custom_call.1} parent=0
    _
  %s11 = ssub.s32 1, %s9
  %s12 = scalar_select 0, %s11, %s9
  $region1: #{tpu_custom_call.1} parent=0
    #allocation2 [shape = 'u8[32768]{0}', space=vmem, size = 0x8000, scoped, tag = 'input window, operand 1']
    #allocation3 [shape = 's32[2]{0}', space=sflag, size = 0x8, scoped, tag = 'scoped memory for tpu_custom_call.1']
    #allocation4 [shape = 's32[2]{0}', space=sflag, size = 0x8, scoped, tag = 'scoped memory for tpu_custom_call.1']
    #allocation5 [shape = 'u8[32768]{0}', space=vmem, size = 0x8000, scoped, tag = 'output window, operand 0']
    %13 = vsyncpa [#allocation3], 0
    %s14 = scalar_lea.sflag [#allocation3], 1
    %15 = vsyncpa %s14, 0
    %16 = vsyncpa [#allocation4], 0
    %s17 = scalar_lea.sflag [#allocation4], 1
    %18 = vsyncpa %s17, 0
    loop: start=0, step=1, limit=4
    $region2: #{tpu_custom_call.1} parent=1 // loop_pre_header
      _
    $region3: #{tpu_custom_call.1} parent=1 // loop_header
      %s20 = sphi 0, %s24
      %p21 = scmp.ge.s32.totalorder %s20, 4
      %s27 = sphi 0, %s39
      %s28 = sphi 0, %s35
      %s29 = sphi 0, %s27
      %s30 = sphi 0, %s28
      %s31 = sphi 0, %s29
      %s32 = sphi 0, %s30
      %s44 = sphi 0, %s46
      %s47 = sphi 0, %s44
      %s48 = sphi 0, %s47
      %s64 = sphi 0, %s48
      %s72 = sphi 0, %s74
      %s75 = sphi 0, %s72
      %s76 = sphi 0, %s75
      %s92 = sphi 0, %s76
      %s96 = sphi 0, %s96
      %s98 = sphi 0, %s96
      %s99 = sphi 0, %s98
      %s113 = sphi 0, %s99
      %s117 = sphi 0, %s117
      %s119 = sphi 0, %s117
      %s120 = sphi 0, %s119
      %s134 = sphi 0, %s120
      %s138 = sphi 0, %s138
      %s140 = sphi 0, %s138
      %s141 = sphi 0, %s140
      %s155 = sphi 0, %s141
      %s159 = sphi 0, %s159
      %s161 = sphi 0, %s159
      %s162 = sphi 0, %s161
      %s176 = sphi 0, %s162
      %s180 = sphi 0, %s180
      %s182 = sphi 0, %s180
      %s183 = sphi 0, %s182
      %s197 = sphi 0, %s183
      %s201 = sphi 0, %s201
      %s203 = sphi 0, %s201
      %s204 = sphi 0, %s203
      %s218 = sphi 0, %s204
      %s226 = sphi 0, %s228
      %s229 = sphi 0, %s226
      %s230 = sphi 0, %s229
      %s246 = sphi 0, %s230
    $region4: #{tpu_custom_call.1} parent=1 // loop_header_branch
      %23 = sbr.rel (%p21) target = $region8
    $region5: #{tpu_custom_call.1} parent=1 // loop_body
      %s25 = ssub.s32 %s20, 1
      %s26 = ssub.s32 %s20, 2
      %s33 = sadd.s32 1, %s28
      %p34 = scmp.ge.s32.totalorder %s33, 1
      %s35 = scalar_select %p34, 0, %s33
      %s36 = sadd.s32 1, %s27
      %s37 = scalar_select %p34, %s36, %s27
      %p38 = scmp.ge.s32.totalorder %s37, 2
      %s39 = scalar_select %p38, 0, %s37
      %s40 = ssub.s32 %s27, %s39
      %s41 = ssub.s32 %s28, %s35
      %s42 = sor.u32 %s40, %s41
      %p43 = scmp.eq.s32.totalorder %s42, 0
      %s45 = sadd.s32 %s44, 1
      %s46 = scalar_select %p43, %s44, %s45
      %p49 = pneg %p43
      %p50 = scmp.eq.s32.totalorder %s20, 1
      %p51 = por %p49, %p50
      %p52 = scmp.ne.s32.totalorder %s44, %s47
      %p53 = scmp.eq.s32.totalorder %s20, 0
      %p54 = por %p52, %p53
      %p55 = scmp.ne.s32.totalorder %s44, %s47
      %p56 = scmp.eq.s32.totalorder %s25, 1
      %p57 = por %p55, %p56
      %p58 = scmp.ne.s32.totalorder %s47, %s48
      %p59 = scmp.eq.s32.totalorder %s25, 0
      %p60 = por %p58, %p59
      %p61 = scmp.ne.s32.totalorder %s47, %s48
      %p62 = scmp.eq.s32.totalorder %s26, 1
      %p63 = por %p61, %p62
      %p65 = scmp.ne.s32.totalorder %s48, %s64
      %p66 = scmp.eq.s32.totalorder %s26, 0
      %p67 = por %p65, %p66
      %s68 = ssub.s32 %s27, %s39
      %s69 = ssub.s32 %s28, %s35
      %s70 = sor.u32 %s68, %s69
      %p71 = scmp.eq.s32.totalorder %s70, 0
      %s73 = sadd.s32 %s72, 1
      %s74 = scalar_select %p71, %s72, %s73
      %p77 = pneg %p71
      %p78 = scmp.eq.s32.totalorder %s20, 1
      %p79 = por %p77, %p78
      %p80 = scmp.ne.s32.totalorder %s72, %s75
      %p81 = scmp.eq.s32.totalorder %s20, 0
      %p82 = por %p80, %p81
      %p83 = scmp.ne.s32.totalorder %s72, %s75
      %p84 = scmp.eq.s32.totalorder %s25, 1
      %p85 = por %p83, %p84
      %p86 = scmp.ne.s32.totalorder %s75, %s76
      %p87 = scmp.eq.s32.totalorder %s25, 0
      %p88 = por %p86, %p87
      %p89 = scmp.ne.s32.totalorder %s75, %s76
      %p90 = scmp.eq.s32.totalorder %s26, 1
      %p91 = por %p89, %p90
      %p93 = scmp.ne.s32.totalorder %s76, %s92
      %p94 = scmp.eq.s32.totalorder %s26, 0
      %p95 = por %p93, %p94
      %s97 = sadd.s32 %s96, 1
      %p100 = scmp.eq.s32.totalorder %s20, 1
      %p101 = scmp.ne.s32.totalorder %s96, %s98
      %p102 = scmp.eq.s32.totalorder %s20, 0
      %p103 = por %p101, %p102
      %p104 = scmp.ne.s32.totalorder %s96, %s98
      %p105 = scmp.eq.s32.totalorder %s25, 1
      %p106 = por %p104, %p105
      %p107 = scmp.ne.s32.totalorder %s98, %s99
      %p108 = scmp.eq.s32.totalorder %s25, 0
      %p109 = por %p107, %p108
      %p110 = scmp.ne.s32.totalorder %s98, %s99
      %p111 = scmp.eq.s32.totalorder %s26, 1
      %p112 = por %p110, %p111
      %p114 = scmp.ne.s32.totalorder %s99, %s113
      %p115 = scmp.eq.s32.totalorder %s26, 0
      %p116 = por %p114, %p115
      %s118 = sadd.s32 %s117, 1
      %p121 = scmp.eq.s32.totalorder %s20, 1
      %p122 = scmp.ne.s32.totalorder %s117, %s119
      %p123 = scmp.eq.s32.totalorder %s20, 0
      %p124 = por %p122, %p123
      %p125 = scmp.ne.s32.totalorder %s117, %s119
      %p126 = scmp.eq.s32.totalorder %s25, 1
      %p127 = por %p125, %p126
      %p128 = scmp.ne.s32.totalorder %s119, %s120
      %p129 = scmp.eq.s32.totalorder %s25, 0
      %p130 = por %p128, %p129
      %p131 = scmp.ne.s32.totalorder %s119, %s120
      %p132 = scmp.eq.s32.totalorder %s26, 1
      %p133 = por %p131, %p132
      %p135 = scmp.ne.s32.totalorder %s120, %s134
      %p136 = scmp.eq.s32.totalorder %s26, 0
      %p137 = por %p135, %p136
      %s139 = sadd.s32 %s138, 1
      %p142 = scmp.eq.s32.totalorder %s20, 1
      %p143 = scmp.ne.s32.totalorder %s138, %s140
      %p144 = scmp.eq.s32.totalorder %s20, 0
      %p145 = por %p143, %p144
      %p146 = scmp.ne.s32.totalorder %s138, %s140
      %p147 = scmp.eq.s32.totalorder %s25, 1
      %p148 = por %p146, %p147
      %p149 = scmp.ne.s32.totalorder %s140, %s141
      %p150 = scmp.eq.s32.totalorder %s25, 0
      %p151 = por %p149, %p150
      %p152 = scmp.ne.s32.totalorder %s140, %s141
      %p153 = scmp.eq.s32.totalorder %s26, 1
      %p154 = por %p152, %p153
      %p156 = scmp.ne.s32.totalorder %s141, %s155
      %p157 = scmp.eq.s32.totalorder %s26, 0
      %p158 = por %p156, %p157
      %s160 = sadd.s32 %s159, 1
      %p163 = scmp.eq.s32.totalorder %s20, 1
      %p164 = scmp.ne.s32.totalorder %s159, %s161
      %p165 = scmp.eq.s32.totalorder %s20, 0
      %p166 = por %p164, %p165
      %p167 = scmp.ne.s32.totalorder %s159, %s161
      %p168 = scmp.eq.s32.totalorder %s25, 1
      %p169 = por %p167, %p168
      %p170 = scmp.ne.s32.totalorder %s161, %s162
      %p171 = scmp.eq.s32.totalorder %s25, 0
      %p172 = por %p170, %p171
      %p173 = scmp.ne.s32.totalorder %s161, %s162
      %p174 = scmp.eq.s32.totalorder %s26, 1
      %p175 = por %p173, %p174
      %p177 = scmp.ne.s32.totalorder %s162, %s176
      %p178 = scmp.eq.s32.totalorder %s26, 0
      %p179 = por %p177, %p178
      %s181 = sadd.s32 %s180, 1
      %p184 = scmp.eq.s32.totalorder %s20, 1
      %p185 = scmp.ne.s32.totalorder %s180, %s182
      %p186 = scmp.eq.s32.totalorder %s20, 0
      %p187 = por %p185, %p186
      %p188 = scmp.ne.s32.totalorder %s180, %s182
      %p189 = scmp.eq.s32.totalorder %s25, 1
      %p190 = por %p188, %p189
      %p191 = scmp.ne.s32.totalorder %s182, %s183
      %p192 = scmp.eq.s32.totalorder %s25, 0
      %p193 = por %p191, %p192
      %p194 = scmp.ne.s32.totalorder %s182, %s183
      %p195 = scmp.eq.s32.totalorder %s26, 1
      %p196 = por %p194, %p195
      %p198 = scmp.ne.s32.totalorder %s183, %s197
      %p199 = scmp.eq.s32.totalorder %s26, 0
      %p200 = por %p198, %p199
      %s202 = sadd.s32 %s201, 1
      %p205 = scmp.eq.s32.totalorder %s20, 1
      %p206 = scmp.ne.s32.totalorder %s201, %s203
      %p207 = scmp.eq.s32.totalorder %s20, 0
      %p208 = por %p206, %p207
      %p209 = scmp.ne.s32.totalorder %s201, %s203
      %p210 = scmp.eq.s32.totalorder %s25, 1
      %p211 = por %p209, %p210
      %p212 = scmp.ne.s32.totalorder %s203, %s204
      %p213 = scmp.eq.s32.totalorder %s25, 0
      %p214 = por %p212, %p213
      %p215 = scmp.ne.s32.totalorder %s203, %s204
      %p216 = scmp.eq.s32.totalorder %s26, 1
      %p217 = por %p215, %p216
      %p219 = scmp.ne.s32.totalorder %s204, %s218
      %p220 = scmp.eq.s32.totalorder %s26, 0
      %p221 = por %p219, %p220
      %s222 = ssub.s32 %s27, %s39
      %s223 = ssub.s32 %s28, %s35
      %s224 = sor.u32 %s222, %s223
      %p225 = scmp.eq.s32.totalorder %s224, 0
      %s227 = sadd.s32 %s226, 1
      %s228 = scalar_select %p225, %s226, %s227
      %p231 = pneg %p225
      %p232 = scmp.eq.s32.totalorder %s20, 1
      %p233 = por %p231, %p232
      %p234 = scmp.ne.s32.totalorder %s226, %s229
      %p235 = scmp.eq.s32.totalorder %s20, 0
      %p236 = por %p234, %p235
      %p237 = scmp.ne.s32.totalorder %s226, %s229
      %p238 = scmp.eq.s32.totalorder %s25, 1
      %p239 = por %p237, %p238
      %p240 = scmp.ne.s32.totalorder %s229, %s230
      %p241 = scmp.eq.s32.totalorder %s25, 0
      %p242 = por %p240, %p241
      %p243 = scmp.ne.s32.totalorder %s229, %s230
      %p244 = scmp.eq.s32.totalorder %s26, 1
      %p245 = por %p243, %p244
      %p247 = scmp.ne.s32.totalorder %s230, %s246
      %p248 = scmp.eq.s32.totalorder %s26, 0
      %p249 = por %p247, %p248
      %p250 = scmp.le.s32.totalorder 1, %s20
      %p251 = scmp.lt.s32.totalorder %s20, 3
      %p252 = pnand %p250, %p251
      %p253 = pneg %p252
      // Predicated region
      $region9: #{tpu_custom_call.1} parent=5 // pred_check
        _
      $region10: #{tpu_custom_call.1} parent=5 // pred_check_branch
        %255 = sbr.rel (%p252) target = $region12
      $region11: #{tpu_custom_call.1} parent=5 // pred_region
        %s256 = ssub.s32 %s20, 1
        // Predicated region
        $region13: #{tpu_custom_call.1} parent=11 // pred_check
          %p257 = pneg %p109
        $region14: #{tpu_custom_call.1} parent=11 // pred_check_branch
          %259 = sbr.rel (%p257) target = $region16
        $region15: #{tpu_custom_call.1} parent=11 // pred_region
          _
        $region16: #{tpu_custom_call.1} parent=11 // pred_fallthru
          _
        // Predicated region
        $region17: #{tpu_custom_call.1} parent=11 // pred_check
          %p260 = pneg %p130
        $region18: #{tpu_custom_call.1} parent=11 // pred_check_branch
          %262 = sbr.rel (%p260) target = $region20
        $region19: #{tpu_custom_call.1} parent=11 // pred_region
          _
        $region20: #{tpu_custom_call.1} parent=11 // pred_fallthru
          _
        // Predicated region
        $region21: #{tpu_custom_call.1} parent=11 // pred_check
          %p263 = pneg %p151
        $region22: #{tpu_custom_call.1} parent=11 // pred_check_branch
          %265 = sbr.rel (%p263) target = $region24
        $region23: #{tpu_custom_call.1} parent=11 // pred_region
          _
        $region24: #{tpu_custom_call.1} parent=11 // pred_fallthru
          _
        // Predicated region
        $region25: #{tpu_custom_call.1} parent=11 // pred_check
          %p266 = pneg %p172
        $region26: #{tpu_custom_call.1} parent=11 // pred_check_branch
          %268 = sbr.rel (%p266) target = $region28
        $region27: #{tpu_custom_call.1} parent=11 // pred_region
          _
        $region28: #{tpu_custom_call.1} parent=11 // pred_fallthru
          _
        // Predicated region
        $region29: #{tpu_custom_call.1} parent=11 // pred_check
          %p269 = pneg %p193
        $region30: #{tpu_custom_call.1} parent=11 // pred_check_branch
          %271 = sbr.rel (%p269) target = $region32
        $region31: #{tpu_custom_call.1} parent=11 // pred_region
          _
        $region32: #{tpu_custom_call.1} parent=11 // pred_fallthru
          _
        // Predicated region
        $region33: #{tpu_custom_call.1} parent=11 // pred_check
          %p272 = pneg %p214
        $region34: #{tpu_custom_call.1} parent=11 // pred_check_branch
          %274 = sbr.rel (%p272) target = $region36
        $region35: #{tpu_custom_call.1} parent=11 // pred_region
          _
        $region36: #{tpu_custom_call.1} parent=11 // pred_fallthru
          _
      $region12: #{tpu_custom_call.1} parent=5 // pred_fallthru
        _
      %p275 = scmp.lt.s32.totalorder %s20, 2
      // Predicated region
      $region37: #{tpu_custom_call.1} parent=5 // pred_check
        %p276 = pneg %p275
      $region38: #{tpu_custom_call.1} parent=5 // pred_check_branch
        %278 = sbr.rel (%p276) target = $region40
      $region39: #{tpu_custom_call.1} parent=5 // pred_region
        // Predicated region
        $region41: #{tpu_custom_call.1} parent=39 // pred_check
          %p279 = pneg %p54
        $region42: #{tpu_custom_call.1} parent=39 // pred_check_branch
          %281 = sbr.rel (%p279) target = $region44
        $region43: #{tpu_custom_call.1} parent=39 // pred_region
          %p282 = scmp.lt.s32.totalorder %s27, 1
          %s283 = scalar_select %p282, %s27, 1
          %p284 = scmp.lt.s32.totalorder %s28, 0
          %s285 = scalar_select %p284, %s28, 0
          %s286 = smul.addr %s283, 4
          %s287 = sadd.s32 %s285, %s286
          %s288 = smul.addr %s287, 8
          %s289 = scalar_lea.vmem %s0, %s288
        $region44: #{tpu_custom_call.1} parent=39 // pred_fallthru
          _
        // Predicated region
        $region45: #{tpu_custom_call.1} parent=39 // pred_check
          %p290 = pneg %p82
        $region46: #{tpu_custom_call.1} parent=39 // pred_check_branch
          %292 = sbr.rel (%p290) target = $region48
        $region47: #{tpu_custom_call.1} parent=39 // pred_region
          %s293 = sand.u32 %s72, 1
          %s294 = scalar_lea.sflag [#allocation3], %s293
          %s295 = sand.u32 %s72, 1
          %s296 = smul.addr %s295, 32
          %s297 = scalar_lea.vmem [#allocation2], %s296
          %s299 = ssub.s32 512, 512
          %300 = vsyncadd %s294, %s299
          %s301 = smul.addr %s27, 4
          %s302 = sadd.s32 %s28, %s301
          %s303 = smul.addr %s302, 128
          %s304 = scalar_lea.hbm %s1, %s303
          %s305 = sshll.u32 %s297, 4
          %s306 = int_to_ptr.vmem [resolvable:$true] %s305
          %311 = dma.hbm_to_vmem [thread:$0]  %s304, 512, %s306, %s294, 128, 128, 8
        $region48: #{tpu_custom_call.1} parent=39 // pred_fallthru
          _
      $region40: #{tpu_custom_call.1} parent=5 // pred_fallthru
        _
      %p312 = scmp.le.s32.totalorder 1, %s20
      %p313 = scmp.lt.s32.totalorder %s20, 3
      %p314 = pnand %p312, %p313
      %p315 = pneg %p314
      // Predicated region
      $region49: #{tpu_custom_call.1} parent=5 // pred_check
        _
      $region50: #{tpu_custom_call.1} parent=5 // pred_check_branch
        %317 = sbr.rel (%p314) target = $region52
      $region51: #{tpu_custom_call.1} parent=5 // pred_region
        %s318 = ssub.s32 %s20, 1
        %s319 = sand.u32 %s75, 1
        %s320 = scalar_lea.sflag [#allocation3], %s319
        %s321 = sand.u32 %s75, 1
        %s322 = smul.addr %s321, 32
        %s323 = scalar_lea.vmem [#allocation2], %s322
        // Predicated region
        $region53: #{tpu_custom_call.1} parent=51 // pred_check
          %p324 = pneg %p88
        $region54: #{tpu_custom_call.1} parent=51 // pred_check_branch
          %326 = sbr.rel (%p324) target = $region56
        $region55: #{tpu_custom_call.1} parent=51 // pred_region
          %327 = dma.done %s320, 512
        $region56: #{tpu_custom_call.1} parent=51 // pred_fallthru
          _
        %p328 = scmp.lt.s32.totalorder %s29, 1
        %s329 = scalar_select %p328, %s29, 1
        %p330 = scmp.lt.s32.totalorder %s30, 0
        %s331 = scalar_select %p330, %s30, 0
        %s332 = smul.addr %s329, 4
        %s333 = sadd.s32 %s331, %s332
        %s334 = smul.addr %s333, 8
        %s335 = scalar_lea.vmem %s0, %s334
        %p336 = pneg %p60
        %p337 = pneg %p57
        %s338 = sand.u32 %s75, 1
        %s339 = scalar_lea.sflag [#allocation3], %s338
        %s340 = sand.u32 %s75, 1
        %s341 = smul.addr %s340, 32
        %s342 = scalar_lea.vmem [#allocation2], %s341
        %p343 = pneg %p88
        %p344 = pneg %p85
        %p345 = pneg %p109
        %p346 = pneg %p106
        %p347 = pneg %p130
        %p348 = pneg %p127
        %p349 = pneg %p151
        %p350 = pneg %p148
        %p351 = pneg %p172
        %p352 = pneg %p169
        %p353 = pneg %p193
        %p354 = pneg %p190
        %p355 = pneg %p214
        %p356 = pneg %p211
        %p357 = pneg %p242
        %p358 = pneg %p239
        %s359 = sand.u32 %s229, 1
        %s360 = scalar_lea.sflag [#allocation4], %s359
        %s361 = sand.u32 %s229, 1
        %s362 = smul.addr %s361, 32
        %s363 = scalar_lea.vmem [#allocation5], %s362
        %p364 = scmp.lt.s32.totalorder %s29, 1
        %s365 = scalar_select %p364, %s29, 1
        %p366 = scmp.lt.s32.totalorder %s30, 0
        %s367 = scalar_select %p366, %s30, 0
        %s368 = smul.addr %s365, 4
        %s369 = sadd.s32 %s367, %s368
        %s370 = smul.addr %s369, 8
        %s371 = scalar_lea.vmem %s0, %s370
        %v372 = vld [vmem:[%s371] sm:$0xff]
        %v373 = vld [vmem:[%s371 + $0x8] sm:$0xff]
        %v374 = vld [vmem:[%s371 + $0x10] sm:$0xff]
        %v375 = vld [vmem:[%s371 + $0x18] sm:$0xff]
        %v376 = vld [vmem:[%s2] sm:$0xff]
        %v377 = vld [vmem:[%s3] sm:$0xff]
        %379 = vset.pattern.permute.xlu0 0
        %380 = vperm.xlu0 %379, %v377
        %v381 = vpop.permute.xlu0 %380
        %vm383 = vcmask 261120
        %v385 = vsel %vm383, %v376, 0
        %387 = vmatprep.subr.mxu0 0.0
        %388 = vmatpush1.msra.mxu0 0.0
        %389 = vmatprep.subr.mxu0 0.0
        %390 = vmatpush1.msra.mxu0 0.0
        %391 = vmatprep.subr.mxu0 0.0
        %392 = vmatpush1.msra.mxu0 0.0
        %393 = vmatprep.subr.mxu0 0.0
        %394 = vmatpush1.msra.mxu0 0.0
        %395 = vmatprep.subr.mxu0 0.0
        %396 = vmatpush1.msra.mxu0 0.0
        %397 = vmatprep.subr.mxu0 0.0
        %398 = vmatpush1.msra.mxu0 0.0
        %399 = vmatprep.subr.mxu0 0.0
        %400 = vmatpush1.msra.mxu0 0.0
        %401 = vmatprep.subr.mxu0 0.0
        %402 = vmatpush1.msra.mxu0 0.0
        %403 = vmatprep.subr.mxu0 0.0
        %404 = vmatpush1.msra.mxu0 0.0
        %405 = vmatprep.subr.mxu0 0.0
        %406 = vmatpush1.msra.mxu0 0.0
        %407 = vmatprep.subr.mxu0 0.0
        %408 = vmatpush1.msra.mxu0 0.0
        %409 = vmatprep.subr.mxu0 0.0
        %410 = vmatpush1.msra.mxu0 0.0
        %411 = vmatprep.subr.mxu0 0.0
        %412 = vmatpush1.msra.mxu0 %v375
        %413 = vmatprep.subr.mxu0 0.0
        %414 = vmatpush1.msra.mxu0 %v374
        %415 = vmatprep.subr.mxu0 0.0
        %416 = vmatpush1.msra.mxu0 %v373
        %417 = vmatprep.subr.mxu0 0.0
        %418 = vmatpush1.msra.mxu0 %v372
        %419 = vmatprep.subr.mxu0 0.0
        %420 = vmatpush2.msra.mxu0 0.0
        %421 = vmatprep.subr.mxu0 0.0
        %422 = vmatpush2.msra.mxu0 0.0
        %423 = vmatprep.subr.mxu0 0.0
        %424 = vmatpush2.msra.mxu0 0.0
        %425 = vmatprep.subr.mxu0 0.0
        %426 = vmatpush2.msra.mxu0 0.0
        %427 = vmatprep.subr.mxu0 0.0
        %428 = vmatpush2.msra.mxu0 0.0
        %429 = vmatprep.subr.mxu0 0.0
        %430 = vmatpush2.msra.mxu0 0.0
        %431 = vmatprep.subr.mxu0 0.0
        %432 = vmatpush2.msra.mxu0 0.0
        %433 = vmatprep.subr.mxu0 0.0
        %434 = vmatpush2.msra.mxu0 0.0
        %435 = vmatprep.subr.mxu0 0.0
        %436 = vmatpush2.msra.mxu0 0.0
        %437 = vmatprep.subr.mxu0 0.0
        %438 = vmatpush2.msra.mxu0 0.0
        %439 = vmatprep.subr.mxu0 0.0
        %440 = vmatpush2.msra.mxu0 0.0
        %441 = vmatprep.subr.mxu0 0.0
        %442 = vmatpush2.msra.mxu0 0.0
        %443 = vmatprep.subr.mxu0 0.0
        %444 = vmatpush2.msra.mxu0 0.0
        %445 = vmatprep.subr.mxu0 0.0
        %446 = vmatpush2.msra.mxu0 0.0
        %447 = vmatprep.subr.mxu0 0.0
        %448 = vmatpush2.msra.mxu0 0.0
        %449 = vmatprep.subr.mxu0 0.0
        %450 = vmatpush2.msra.mxu0 0.0
        %451 = vmatprep.mubr.f32.mxu0 0.0
        %452 = vmatmul.mubr.f32.gmra.mxu0 %v385
        %v453 = vpop.f32.mrf.mxu0
        %v454 = vadd.f32 %v381, %v453
        %v455 = vpop.f32.mrf.mxu0
        %456 = vdwg.mxu0
        %vm457 = vcmask 523264
        %v458 = vsel %vm457, %v454, 0.0
        %v459 = vrot.slane %v458, 4
        %v460 = vadd.f32 %v458, %v459
        %v461 = vrot.slane %v460, 2
        %v462 = vadd.f32 %v460, %v461
        %v463 = vrot.slane %v462, 1
        %v464 = vadd.f32 %v462, %v463
        %v465 = vrcp.pop 8.0
        %v466 = vmul.f32 %v464, %v465
        %v467 = vsub.f32 %v454, %v466
        %v468 = vmul.f32 %v467, %v467
        %v469 = vsel %vm457, %v468, 0.0
        %v470 = vrot.slane %v469, 4
        %v471 = vadd.f32 %v469, %v470
        %v472 = vrot.slane %v471, 2
        %v473 = vadd.f32 %v471, %v472
        %v474 = vrot.slane %v473, 1
        %v475 = vadd.f32 %v473, %v474
        %v476 = vmul.f32 %v475, %v465
        %v477 = vadd.f32 %v476, 1e-05
        %v478 = vrsqrt.pop %v477
        %v479 = vmul.f32 %v467, %v478
        %v480 = vld [vmem:[%s4] sm:$0xff]
        %482 = vset.pattern.permute.xlu0 0
        %483 = vperm.xlu0 %482, %v480
        %v484 = vpop.permute.xlu0 %483
        %v486 = vmul.f32 %v479, %v484
        %v487 = vld [vmem:[%s5] sm:$0xff]
        %489 = vset.pattern.permute.xlu0 0
        %490 = vperm.xlu0 %489, %v487
        %v491 = vpop.permute.xlu0 %490
        %v493 = vadd.f32 %v486, %v491
        %v494 = vmax.f32 %v493, 0.0
        %v495 = vld [vmem:[%s6] sm:$0xff]
        %v496 = vld [vmem:[%s6 + $0x8] sm:$0xff]
        %v497 = vld [vmem:[%s6 + $0x10] sm:$0xff]
        %v498 = vld [vmem:[%s6 + $0x18] sm:$0xff]
        %v499 = vld [vmem:[%s7] sm:$0xff]
        %v500 = vld [vmem:[%s7 + $0x8] sm:$0xff]
        %v501 = vld [vmem:[%s7 + $0x10] sm:$0xff]
        %v502 = vld [vmem:[%s7 + $0x18] sm:$0xff]
        %504 = vset.pattern.permute.xlu0 0
        %505 = vperm.xlu0 %504, %v499
        %v506 = vpop.permute.xlu0 %505
        %509 = vset.pattern.permute.xlu0 0
        %510 = vperm.xlu0 %509, %v500
        %v511 = vpop.permute.xlu0 %510
        %514 = vset.pattern.permute.xlu0 0
        %515 = vperm.xlu0 %514, %v501
        %v516 = vpop.permute.xlu0 %515
        %519 = vset.pattern.permute.xlu0 0
        %520 = vperm.xlu0 %519, %v502
        %v521 = vpop.permute.xlu0 %520
        %vm523 = vcmask 64512
        %v525 = vsel %vm523, %v495, 0
        %v528 = vsel %vm523, %v496, 0
        %v531 = vsel %vm523, %v497, 0
        %v534 = vsel %vm523, %v498, 0
        %536 = vmatprep.subr.mxu0 0.0
        %537 = vmatpush1.msra.mxu0 0.0
        %538 = vmatprep.subr.mxu0 0.0
        %539 = vmatpush1.msra.mxu0 0.0
        %540 = vmatprep.subr.mxu0 0.0
        %541 = vmatpush1.msra.mxu0 0.0
        %542 = vmatprep.subr.mxu0 0.0
        %543 = vmatpush1.msra.mxu0 0.0
        %544 = vmatprep.subr.mxu0 0.0
        %545 = vmatpush1.msra.mxu0 0.0
        %546 = vmatprep.subr.mxu0 0.0
        %547 = vmatpush1.msra.mxu0 0.0
        %548 = vmatprep.subr.mxu0 0.0
        %549 = vmatpush1.msra.mxu0 0.0
        %550 = vmatprep.subr.mxu0 0.0
        %551 = vmatpush1.msra.mxu0 0.0
        %552 = vmatprep.subr.mxu0 0.0
        %553 = vmatpush1.msra.mxu0 0.0
        %554 = vmatprep.subr.mxu0 0.0
        %555 = vmatpush1.msra.mxu0 0.0
        %556 = vmatprep.subr.mxu0 0.0
        %557 = vmatpush1.msra.mxu0 0.0
        %558 = vmatprep.subr.mxu0 0.0
        %559 = vmatpush1.msra.mxu0 0.0
        %560 = vmatprep.subr.mxu0 0.0
        %561 = vmatpush1.msra.mxu0 0.0
        %562 = vmatprep.subr.mxu0 0.0
        %563 = vmatpush1.msra.mxu0 0.0
        %564 = vmatprep.subr.mxu0 0.0
        %565 = vmatpush1.msra.mxu0 0.0
        %566 = vmatprep.subr.mxu0 0.0
        %567 = vmatpush1.msra.mxu0 %v494
        %568 = vmatprep.subr.mxu0 0.0
        %569 = vmatpush2.msra.mxu0 0.0
        %570 = vmatprep.subr.mxu0 0.0
        %571 = vmatpush2.msra.mxu0 0.0
        %572 = vmatprep.subr.mxu0 0.0
        %573 = vmatpush2.msra.mxu0 0.0
        %574 = vmatprep.subr.mxu0 0.0
        %575 = vmatpush2.msra.mxu0 0.0
        %576 = vmatprep.subr.mxu0 0.0
        %577 = vmatpush2.msra.mxu0 0.0
        %578 = vmatprep.subr.mxu0 0.0
        %579 = vmatpush2.msra.mxu0 0.0
        %580 = vmatprep.subr.mxu0 0.0
        %581 = vmatpush2.msra.mxu0 0.0
        %582 = vmatprep.subr.mxu0 0.0
        %583 = vmatpush2.msra.mxu0 0.0
        %584 = vmatprep.subr.mxu0 0.0
        %585 = vmatpush2.msra.mxu0 0.0
        %586 = vmatprep.subr.mxu0 0.0
        %587 = vmatpush2.msra.mxu0 0.0
        %588 = vmatprep.subr.mxu0 0.0
        %589 = vmatpush2.msra.mxu0 0.0
        %590 = vmatprep.subr.mxu0 0.0
        %591 = vmatpush2.msra.mxu0 0.0
        %592 = vmatprep.subr.mxu0 0.0
        %593 = vmatpush2.msra.mxu0 0.0
        %594 = vmatprep.subr.mxu0 0.0
        %595 = vmatpush2.msra.mxu0 0.0
        %596 = vmatprep.subr.mxu0 0.0
        %597 = vmatpush2.msra.mxu0 0.0
        %598 = vmatprep.subr.mxu0 0.0
        %599 = vmatpush2.msra.mxu0 0.0
        %600 = vmatprep.mubr.f32.mxu0 0.0
        %601 = vmatmul.mubr.f32.gmra.mxu0 %v525
        %v602 = vpop.f32.mrf.mxu0
        %v603 = vadd.f32 %v506, %v602
        %v604 = vpop.f32.mrf.mxu0
        %605 = vmatprep.mubr.f32.mxu0 0.0
        %606 = vmatmul.mubr.f32.gmra.mxu0 %v528
        %v607 = vpop.f32.mrf.mxu0
        %v608 = vadd.f32 %v511, %v607
        %v609 = vpop.f32.mrf.mxu0
        %610 = vmatprep.mubr.f32.mxu0 0.0
        %611 = vmatmul.mubr.f32.gmra.mxu0 %v531
        %v612 = vpop.f32.mrf.mxu0
        %v613 = vadd.f32 %v516, %v612
        %v614 = vpop.f32.mrf.mxu0
        %615 = vmatprep.mubr.f32.mxu0 0.0
        %616 = vmatmul.mubr.f32.gmra.mxu0 %v534
        %v617 = vpop.f32.mrf.mxu0
        %v618 = vadd.f32 %v521, %v617
        %v619 = vpop.f32.mrf.mxu0
        %620 = vdwg.mxu0
        %v621 = vld [vmem:[%s323] sm:$0xff]
        %v622 = vld [vmem:[%s323 + $0x8] sm:$0xff]
        %v623 = vld [vmem:[%s323 + $0x10] sm:$0xff]
        %v624 = vld [vmem:[%s323 + $0x18] sm:$0xff]
        %v625 = vadd.f32 %v621, %v603
        %v626 = vadd.f32 %v622, %v608
        %v627 = vadd.f32 %v623, %v613
        %v628 = vadd.f32 %v624, %v618
        %629 = vst.msk [vmem:[%s363] sm:$0xff] %vm457, %v625
        %630 = vst.msk [vmem:[%s363 + $0x8] sm:$0xff] %vm457, %v626
        %631 = vst.msk [vmem:[%s363 + $0x10] sm:$0xff] %vm457, %v627
        %632 = vst.msk [vmem:[%s363 + $0x18] sm:$0xff] %vm457, %v628
        %s633 = sand.u32 %s229, 1
        %s634 = scalar_lea.sflag [#allocation4], %s633
        %s635 = sand.u32 %s229, 1
        %s636 = smul.addr %s635, 32
        %s637 = scalar_lea.vmem [#allocation5], %s636
        // Predicated region
        $region57: #{tpu_custom_call.1} parent=51 // pred_check
          %p638 = pneg %p239
        $region58: #{tpu_custom_call.1} parent=51 // pred_check_branch
          %640 = sbr.rel (%p638) target = $region60
        $region59: #{tpu_custom_call.1} parent=51 // pred_region
          %s642 = ssub.s32 512, 512
          %643 = vsyncadd %s634, %s642
          %s644 = smul.addr %s29, 4
          %s645 = sadd.s32 %s30, %s644
          %s646 = smul.addr %s645, 128
          %s647 = scalar_lea.hbm %s8, %s646
          %s648 = sshll.u32 %s637, 4
          %s649 = int_to_ptr.vmem [resolvable:$true] %s648
          %654 = dma.vmem_to_hbm [thread:$0]  %s649, 512, %s647, %s634, 128, 128, 8
        $region60: #{tpu_custom_call.1} parent=51 // pred_fallthru
          _
      $region52: #{tpu_custom_call.1} parent=5 // pred_fallthru
        _
      %p655 = scmp.le.s32.totalorder 2, %s20
      // Predicated region
      $region61: #{tpu_custom_call.1} parent=5 // pred_check
        %p656 = pneg %p655
      $region62: #{tpu_custom_call.1} parent=5 // pred_check_branch
        %658 = sbr.rel (%p656) target = $region64
      $region63: #{tpu_custom_call.1} parent=5 // pred_region
        %s659 = ssub.s32 %s20, 2
        // Predicated region
        $region65: #{tpu_custom_call.1} parent=63 // pred_check
          %p660 = pneg %p245
        $region66: #{tpu_custom_call.1} parent=63 // pred_check_branch
          %662 = sbr.rel (%p660) target = $region68
        $region67: #{tpu_custom_call.1} parent=63 // pred_region
          %s663 = sand.u32 %s230, 1
          %s664 = scalar_lea.sflag [#allocation4], %s663
          %s665 = sand.u32 %s230, 1
          %s666 = smul.addr %s665, 32
          %s667 = scalar_lea.vmem [#allocation5], %s666
          %668 = dma.done %s664, 512
        $region68: #{tpu_custom_call.1} parent=63 // pred_fallthru
          _
      $region64: #{tpu_custom_call.1} parent=5 // pred_fallthru
        _
    $region6: #{tpu_custom_call.1} parent=1 // loop_footer
      %s24 = sadd.s32 1, %s20
    $region7: #{tpu_custom_call.1} parent=1 // loop_footer_branch
      %19 = sbr.rel target = $region3
    $region8: #{tpu_custom_call.1} parent=1 // loop_exit
      _
    %669 = vsyncpa [#allocation3], 1
    %s670 = scalar_lea.sflag [#allocation3], 1
    %671 = vsyncpa %s670, 1
    %672 = vsyncpa [#allocation4], 1
    %s673 = scalar_lea.sflag [#allocation4], 1
    %674 = vsyncpa %s673, 1

</llo_original>
